<compile_context>
chip_gen: v6e
topology: v6e:2x2x1
jax: 0.10.0
libtpu: 0.0.40
codegen_flags: <defaults>
</compile_context>

<pallas_src>
import functools

import jax
import jax.numpy as jnp
from jax import lax
from jax.experimental import pallas as pl
from jax.experimental.pallas import tpu as pltpu


def _vq_kernel(num_embeddings, m_tile, m_valid,
               xt_ref, e_ref, esq_ref, qt_ref, idx_ref, loss_ref):
    """Fused VQ forward for one tile of M tokens.

    xt_ref : (Cp, Mt)  inputs, channels-first, tokens on lanes
    e_ref  : (Cp, K)   codebook
    esq_ref: (K, 1)    per-code squared norms
    qt_ref : (Cp, Mt)  quantized output (lane-dense)
    idx_ref: (1, Mt)   nearest-code indices (lane-dense)
    loss_ref:(1, 128)  per-tile partial sum of ||x - q||^2 (broadcast on lanes)
    """
    x_t = xt_ref[...]                       # (Cp, Mt) f32
    e = e_ref[...]                          # (Cp, K)  f32

    # Reduced distance: d[k, m] = ||e_k||^2 - 2 <e_k, x_m>
    # (the per-token constant ||x_m||^2 does not change the argmin).
    dots = lax.dot_general(e, x_t, (((0,), (0,)), ((), ())),
                           preferred_element_type=jnp.float32)      # (K, Mt)
    scores = esq_ref[...] - 2.0 * dots                               # (K, Mt)

    min_val = jnp.min(scores, axis=0, keepdims=True)                 # (1, Mt)
    k_iota = lax.broadcasted_iota(jnp.int32, scores.shape, 0)        # (K, Mt)
    # first index attaining the minimum (deterministic tie-break)
    idx = jnp.min(jnp.where(scores == min_val, k_iota, num_embeddings),
                  axis=0, keepdims=True)                             # (1, Mt) i32

    # Codebook lookup as a one-hot matmul: q_t = E @ one_hot  -> (Cp, Mt),
    # M on the MXU width / lane axis (lane-dense result and store).
    one_hot = (k_iota == idx).astype(jnp.float32)                    # (K, Mt)
    q_t = jnp.dot(e, one_hot, preferred_element_type=jnp.float32)    # (Cp, Mt)

    qt_ref[...] = q_t.astype(qt_ref.dtype)
    idx_ref[...] = idx

    # Commitment-loss partial: sum over valid tokens of ||x - q||^2.
    diff = x_t - q_t
    if m_valid % m_tile != 0:   # static: mask only if this problem has padding
        col = (lax.broadcasted_iota(jnp.int32, (1, m_tile), 1)
               + pl.program_id(0) * m_tile)
        diff = jnp.where(col < m_valid, diff, 0.0)
    part = jnp.sum(jnp.sum(diff * diff, axis=1, keepdims=True),
                   axis=0, keepdims=True)                            # (1, 1)
    loss_ref[...] = jnp.broadcast_to(part, (1, 128))


def vector_quantizer_forward(x, e_i_ts):
    """VectorQuantizer.forward (use_ema=True, inference).

    x      : (N, C, D, H, W)  float32, C == embedding_dim
    e_i_ts : (C, K)           codebook (embedding_dim, num_embeddings)

    Returns (quantized_x, dictionary_loss, commitment_loss, encoding_indices)
    matching the PyTorch module's forward values (straight-through estimator
    only affects gradients, so quantized_x's value is the codebook lookup).
    """
    N, C, D, H, W = x.shape
    Cd, K = e_i_ts.shape
    assert Cd == C
    M = N * D * H * W

    # Layout glue only: channels-first flat (C, M), tokens on the lane axis.
    x_t = jnp.transpose(x, (1, 0, 2, 3, 4)).reshape(C, M)

    # Pad channels to the 8-sublane granule, tokens to the lane-tile size.
    m_tile = 256 if M >= 256 else 128
    c_pad = max(8, -(-C // 8) * 8)
    m_pad = -(-M // m_tile) * m_tile
    n_tiles = m_pad // m_tile

    x_p = jnp.pad(x_t, ((0, c_pad - C), (0, m_pad - M)))
    e_p = jnp.pad(e_i_ts, ((0, c_pad - C), (0, 0)))
    e_sq = jnp.sum(e_i_ts * e_i_ts, axis=0).reshape(K, 1)

    kernel = functools.partial(_vq_kernel, K, m_tile, M)
    q_t, idx, loss_part = pl.pallas_call(
        kernel,
        out_shape=(
            jax.ShapeDtypeStruct((c_pad, m_pad), x.dtype),
            jax.ShapeDtypeStruct((1, m_pad), jnp.int32),
            jax.ShapeDtypeStruct((1, n_tiles * 128), jnp.float32),
        ),
        grid=(n_tiles,),
        in_specs=[
            pl.BlockSpec((c_pad, m_tile), lambda i: (0, i)),   # x tile
            pl.BlockSpec((c_pad, K), lambda i: (0, 0)),        # full codebook
            pl.BlockSpec((K, 1), lambda i: (0, 0)),            # ||e_k||^2
        ],
        out_specs=(
            pl.BlockSpec((c_pad, m_tile), lambda i: (0, i)),
            pl.BlockSpec((1, m_tile), lambda i: (0, i)),
            pl.BlockSpec((1, 128), lambda i: (0, i)),
        ),
        compiler_params=pltpu.CompilerParams(
            dimension_semantics=("parallel",)),
    )(x_p, e_p, e_sq)

    quantized = q_t[:C, :M].reshape(C, N, D, H, W).transpose(1, 0, 2, 3, 4)
    encoding_indices = idx[0, :M].reshape(N, D * H * W)
    commitment_loss = jnp.sum(loss_part[0, ::128]) / (N * C * D * H * W)
    dictionary_loss = None   # use_ema=True in the reference module
    return quantized, dictionary_loss, commitment_loss, encoding_indices


if __name__ == "__main__":
    embedding_dim = 8
    num_embeddings = 128
    N, D, H, W = 2, 4, 8, 8

    key = jax.random.PRNGKey(0)
    k_e, k_x = jax.random.split(key)
    limit = 3.0 ** 0.5
    e_i_ts = jax.random.uniform(k_e, (embedding_dim, num_embeddings),
                                jnp.float32, -limit, limit)
    x = jax.random.normal(k_x, (N, embedding_dim, D, H, W), jnp.float32)

    fwd = jax.jit(vector_quantizer_forward)
    quantized, dict_loss, commit_loss, enc_idx = fwd(x, e_i_ts)
    jax.block_until_ready((quantized, commit_loss, enc_idx))

    # Plain-JAX reference of the PyTorch forward for a correctness cross-check.
    flat_x = jnp.transpose(x, (0, 2, 3, 4, 1)).reshape(-1, embedding_dim)
    dist = (jnp.sum(flat_x ** 2, axis=1, keepdims=True)
            - 2.0 * flat_x @ e_i_ts
            + jnp.sum(e_i_ts ** 2, axis=0, keepdims=True))
    ref_idx = jnp.argmin(dist, axis=1)
    ref_q = e_i_ts.T[ref_idx].reshape(N, D, H, W, embedding_dim)
    ref_q = jnp.transpose(ref_q, (0, 4, 1, 2, 3))
    ref_loss = jnp.mean((x - ref_q) ** 2)

    assert quantized.shape == x.shape, quantized.shape
    assert enc_idx.shape == (N, D * H * W), enc_idx.shape
    assert dict_loss is None
    assert jnp.all(jnp.isfinite(quantized))
    assert jnp.array_equal(enc_idx.reshape(-1), ref_idx)
    assert jnp.allclose(quantized, ref_q, atol=1e-5)
    assert jnp.allclose(commit_loss, ref_loss, atol=1e-5, rtol=1e-5)
    print("KERNEL_OK")
</pallas_src>

<mosaic_0001>
module attributes {stable_mosaic.version = 11 : i64} {
  func.func @_vq_kernel(%arg0: i32, %arg1: memref<8x256xf32, #tpu.memory_space<vmem>>, %arg2: memref<8x128xf32, #tpu.memory_space<vmem>>, %arg3: memref<128x1xf32, #tpu.memory_space<vmem>>, %arg4: memref<8x256xf32, #tpu.memory_space<vmem>>, %arg5: memref<1x256xi32, #tpu.memory_space<vmem>>, %arg6: memref<1x128xf32, #tpu.memory_space<vmem>>) attributes {dimension_semantics = [#tpu.dimension_semantics<parallel>], iteration_bounds = array<i64: 2>, scalar_prefetch = 0 : i64, scratch_operands = 0 : i64, tpu.core_type = #tpu.core_type<tc>, window_params = [{transform_indices = @transform_0, window_bounds = array<i64: 8, 256>}, {pipeline_mode = #tpu.pipeline_mode<synchronous>, transform_indices = @transform_1, window_bounds = array<i64: 8, 128>}, {pipeline_mode = #tpu.pipeline_mode<synchronous>, transform_indices = @transform_2, window_bounds = array<i64: 128, 1>}, {transform_indices = @transform_3, window_bounds = array<i64: 8, 256>}, {transform_indices = @transform_4, window_bounds = array<i64: 1, 256>}, {transform_indices = @transform_5, window_bounds = array<i64: 1, 128>}]} {
    %c0 = arith.constant 0 : index
    %c0_0 = arith.constant 0 : index
    %0 = vector.load %arg1[%c0, %c0_0] : memref<8x256xf32, #tpu.memory_space<vmem>>, vector<8x256xf32>
    %c0_1 = arith.constant 0 : index
    %c0_2 = arith.constant 0 : index
    %1 = vector.load %arg2[%c0_1, %c0_2] : memref<8x128xf32, #tpu.memory_space<vmem>>, vector<8x128xf32>
    %cst = arith.constant dense<0.000000e+00> : vector<128x256xf32>
    %2 = tpu.matmul %1, %0, %cst {dimension_numbers = #tpu.dot_dimension_numbers<[0], [0], [1], [1], [0, 1, 1, 1], [], []>} : vector<8x128xf32>, vector<8x256xf32>, vector<128x256xf32> -> vector<128x256xf32>
    %c0_3 = arith.constant 0 : index
    %c0_4 = arith.constant 0 : index
    %3 = vector.load %arg3[%c0_3, %c0_4] : memref<128x1xf32, #tpu.memory_space<vmem>>, vector<128x1xf32>
    %cst_5 = arith.constant 2.000000e+00 : f32
    %4 = vector.broadcast %cst_5 : f32 to vector<128x256xf32>
    %5 = arith.mulf %4, %2 : vector<128x256xf32>
    %6 = vector.broadcast %3 : vector<128x1xf32> to vector<128x256xf32>
    %7 = arith.subf %6, %5 : vector<128x256xf32>
    %cst_6 = arith.constant dense<0x7F800000> : vector<256xf32>
    %8 = vector.multi_reduction <minimumf>, %7, %cst_6 [0] : vector<128x256xf32> to vector<256xf32>
    %9 = vector.shape_cast %8 : vector<256xf32> to vector<1x256xf32>
    %10 = tpu.iota {dimensions = array<i32: 0>} : vector<128x256xi32>
    %11 = vector.broadcast %9 : vector<1x256xf32> to vector<128x256xf32>
    %12 = arith.cmpf oeq, %7, %11 : vector<128x256xf32>
    %c128_i32 = arith.constant 128 : i32
    %13 = vector.broadcast %c128_i32 : i32 to vector<128x256xi32>
    %14 = arith.select %12, %10, %13 : vector<128x256xi1>, vector<128x256xi32>
    %cst_7 = arith.constant dense<2147483647> : vector<256xi32>
    %15 = vector.multi_reduction <minsi>, %14, %cst_7 [0] : vector<128x256xi32> to vector<256xi32>
    %16 = vector.shape_cast %15 : vector<256xi32> to vector<1x256xi32>
    %17 = vector.broadcast %16 : vector<1x256xi32> to vector<128x256xi32>
    %18 = arith.cmpi eq, %10, %17 : vector<128x256xi32>
    %19 = arith.extui %18 : vector<128x256xi1> to vector<128x256xi32>
    %20 = arith.sitofp %19 : vector<128x256xi32> to vector<128x256xf32>
    %cst_8 = arith.constant dense<0.000000e+00> : vector<8x256xf32>
    %21 = tpu.matmul %1, %20, %cst_8 {dimension_numbers = #tpu.dot_dimension_numbers<[1], [0], [0], [1], [0, 0, 1, 1], [], []>} : vector<8x128xf32>, vector<128x256xf32>, vector<8x256xf32> -> vector<8x256xf32>
    %c0_9 = arith.constant 0 : index
    %c0_10 = arith.constant 0 : index
    %22 = vector.load %arg4[%c0_9, %c0_10] : memref<8x256xf32, #tpu.memory_space<vmem>>, vector<8x256xf32>
    tpu.vector_store %arg4[%c0_9, %c0_10], %21 {strides = array<i32>} : memref<8x256xf32, #tpu.memory_space<vmem>>, vector<8x256xf32>,
    %c0_11 = arith.constant 0 : index
    %c0_12 = arith.constant 0 : index
    %23 = vector.load %arg5[%c0_11, %c0_12] : memref<1x256xi32, #tpu.memory_space<vmem>>, vector<1x256xi32>
    tpu.vector_store %arg5[%c0_11, %c0_12], %16 {strides = array<i32>} : memref<1x256xi32, #tpu.memory_space<vmem>>, vector<1x256xi32>,
    %24 = arith.subf %0, %21 : vector<8x256xf32>
    %25 = arith.mulf %24, %24 : vector<8x256xf32>
    %cst_13 = arith.constant dense<0.000000e+00> : vector<8xf32>
    %26 = vector.multi_reduction <add>, %25, %cst_13 [1] : vector<8x256xf32> to vector<8xf32>
    %27 = vector.shape_cast %26 : vector<8xf32> to vector<8x1xf32>
    %cst_14 = arith.constant dense<0.000000e+00> : vector<1xf32>
    %28 = vector.multi_reduction <add>, %27, %cst_14 [0] : vector<8x1xf32> to vector<1xf32>
    %29 = vector.shape_cast %28 : vector<1xf32> to vector<1x1xf32>
    %30 = vector.shape_cast %29 : vector<1x1xf32> to vector<1x1xf32>
    %31 = vector.broadcast %30 : vector<1x1xf32> to vector<1x128xf32>
    %c0_15 = arith.constant 0 : index
    %c0_16 = arith.constant 0 : index
    %32 = vector.load %arg6[%c0_15, %c0_16] : memref<1x128xf32, #tpu.memory_space<vmem>>, vector<1x128xf32>
    tpu.vector_store %arg6[%c0_15, %c0_16], %31 {strides = array<i32>} : memref<1x128xf32, #tpu.memory_space<vmem>>, vector<1x128xf32>,
    return
  }
  func.func @transform_0(%arg0: i32) -> (i32, i32) {
    %c0_i32 = arith.constant 0 : i32
    %c0_i32_0 = arith.constant 0 : i32
    return %c0_i32, %arg0 : i32, i32
  }
  func.func @transform_1(%arg0: i32) -> (i32, i32) {
    %c0_i32 = arith.constant 0 : i32
    %c0_i32_0 = arith.constant 0 : i32
    %c0_i32_1 = arith.constant 0 : i32
    return %c0_i32, %c0_i32_0 : i32, i32
  }
  func.func @transform_2(%arg0: i32) -> (i32, i32) {
    %c0_i32 = arith.constant 0 : i32
    %c0_i32_0 = arith.constant 0 : i32
    %c0_i32_1 = arith.constant 0 : i32
    return %c0_i32, %c0_i32_0 : i32, i32
  }
  func.func @transform_3(%arg0: i32) -> (i32, i32) {
    %c0_i32 = arith.constant 0 : i32
    %c0_i32_0 = arith.constant 0 : i32
    return %c0_i32, %arg0 : i32, i32
  }
  func.func @transform_4(%arg0: i32) -> (i32, i32) {
    %c0_i32 = arith.constant 0 : i32
    %c0_i32_0 = arith.constant 0 : i32
    return %c0_i32, %arg0 : i32, i32
  }
  func.func @transform_5(%arg0: i32) -> (i32, i32) {
    %c0_i32 = arith.constant 0 : i32
    %c0_i32_0 = arith.constant 0 : i32
    return %c0_i32, %arg0 : i32, i32
  }
}

</mosaic_0001>

<llo_original>
// kernel: squeeze.2
$region0: #{squeeze.2}
  %s0 = inlined_call_operand.vmem [shape: s32[512], index: 0, kind: input, shape index: {}]
  %s1 = inlined_call_operand.hbm [shape: s32[2,256], index: 1, kind: output, shape index: {}]
  $region1: #{squeeze.2} parent=0
    #allocation0 [shape = 'u8[2048]{0}', space=vmem, size = 0x800, scoped, tag = 'operand span for operand 1']
    #allocation1 [shape = 's32[1]{0}', space=sflag, size = 0x4, scoped, tag = 'scoped memory for squeeze.2']
    #allocation2 [shape = 'u8[8192]{0}', space=vmem, size = 0x2000, scoped, tag = 'scoped mem for output reshape']
    #allocation3 [shape = 'u8[4096]{0}', space=vmem, size = 0x1000, scoped, tag = 'scoped mem for input reshape']
    %2 = vsyncpa [#allocation1], 0
    %s4 = sshll.u32 1, 4
    %s5 = ssub.s32 %s4, 1
    %v6 = vld [vmem:[%s0] sm:%s5]
    %7 = vst [vmem:[#allocation3] sm:%s5] %v6
    %v8 = vld [vmem:[#allocation3] sm:$0xf]
    %9 = vst [vmem:[#allocation2] ss:$8 sm:$0x3] %v8
    %s10 = scalar_lea.vmem [#allocation2], 4294967281
    %11 = vst [vmem:[%s10] ss:$8 sm:$0xc] %v8
    %s13 = sshll.u32 1, 2
    %s14 = ssub.s32 %s13, 1
    %v16 = vld [vmem:[#allocation2] sm:%s14]
    %s17 = sshll.u32 1, 2
    %s18 = ssub.s32 %s17, 1
    %19 = vst [vmem:[#allocation0] sm:%s18] %v16
    %s20 = scalar_lea.vmem [#allocation2], 8
    %v21 = vld [vmem:[%s20] sm:%s14]
    %s22 = sshll.u32 1, 2
    %s23 = ssub.s32 %s22, 1
    %s24 = scalar_lea.vmem [#allocation0], 2
    %25 = vst [vmem:[%s24] sm:%s23] %v21
    %s27 = ssub.s32 64, 64
    %28 = vsyncadd [#allocation1], %s27
    %s30 = sshll.u32 [#allocation0], 4
    %s31 = int_to_ptr.vmem [resolvable:$true] %s30
    %33 = dma.vmem_to_hbm [thread:$0]  %s31, 64, %s1, [#allocation1]
    %34 = dma.done [#allocation1], 64
    %35 = vsyncpa [#allocation1], 1

// kernel: vector_quantizer_forward.1
$region0: #{vector_quantizer_forward.1}
  #allocation0 [shape = 'u32[]', space=smem, size = 0x4, offset = 0x4, fixed_abs, tag = 'smem constant byte address 0x4 - core index']
  #allocation1 [shape = 'u32[144,128]{1,0:T(1,128)}', space=vmem, size = 0x12000, scoped, tag = 'internal scratch']
  %s0 = inlined_call_operand.vmem [shape: f32[8,512], index: 0, kind: input, shape index: {}]
  %s1 = inlined_call_operand.vmem [shape: f32[8,128], index: 1, kind: input, shape index: {}]
  %s2 = inlined_call_operand.vmem [shape: f32[128,1], index: 2, kind: input, shape index: {}]
  %s3 = inlined_call_operand.vmem [shape: f32[8,512], index: 3, kind: output, shape index: {0}]
  %s4 = inlined_call_operand.vmem [shape: s32[1,512], index: 4, kind: output, shape index: {1}]
  %s5 = inlined_call_operand.vmem [shape: f32[1,256], index: 5, kind: output, shape index: {2}]
  %6 = xla_tuple %s3, %s4, %s5
  %s7 = sld [smem:[#allocation0]]
  $region61: #{vector_quantizer_forward.1} parent=0
    _
  %s9 = ssub.s32 1, %s7
  %s10 = scalar_select 0, %s9, %s7
  loop: start=0, step=1, limit=4
  $region2: #{vector_quantizer_forward.1} parent=0 // loop_pre_header
    _
  $region3: #{vector_quantizer_forward.1} parent=0 // loop_header
    %s12 = sphi 0, %s16
    %p13 = scmp.ge.s32.totalorder %s12, 4
    %s22 = sphi 0, %s24
    %s25 = sphi 0, %s22
    %s26 = sphi 0, %s25
    %s42 = sphi 0, %s26
    %s46 = sphi 0, %s46
    %s48 = sphi 0, %s46
    %s49 = sphi 0, %s48
    %s63 = sphi 0, %s49
    %s67 = sphi 0, %s67
    %s69 = sphi 0, %s67
    %s70 = sphi 0, %s69
    %s84 = sphi 0, %s70
    %s90 = sphi 0, %s92
    %s93 = sphi 0, %s90
    %s94 = sphi 0, %s93
    %s110 = sphi 0, %s94
    %s116 = sphi 0, %s118
    %s119 = sphi 0, %s116
    %s120 = sphi 0, %s119
    %s136 = sphi 0, %s120
    %s142 = sphi 0, %s144
    %s145 = sphi 0, %s142
    %s146 = sphi 0, %s145
    %s162 = sphi 0, %s146
  $region4: #{vector_quantizer_forward.1} parent=0 // loop_header_branch
    %15 = sbr.rel (%p13) target = $region8
  $region5: #{vector_quantizer_forward.1} parent=0 // loop_body
    %s17 = ssub.s32 %s12, 1
    %s18 = ssub.s32 %s12, 2
    %s19 = sadd.s32 %s12, 1
    %s20 = ssub.s32 %s12, %s19
    %p21 = scmp.eq.s32.totalorder %s20, 0
    %s23 = sadd.s32 %s22, 1
    %s24 = scalar_select %p21, %s22, %s23
    %p27 = pneg %p21
    %p28 = scmp.eq.s32.totalorder %s12, 1
    %p29 = por %p27, %p28
    %p30 = scmp.ne.s32.totalorder %s22, %s25
    %p31 = scmp.eq.s32.totalorder %s12, 0
    %p32 = por %p30, %p31
    %p33 = scmp.ne.s32.totalorder %s22, %s25
    %p34 = scmp.eq.s32.totalorder %s17, 1
    %p35 = por %p33, %p34
    %p36 = scmp.ne.s32.totalorder %s25, %s26
    %p37 = scmp.eq.s32.totalorder %s17, 0
    %p38 = por %p36, %p37
    %p39 = scmp.ne.s32.totalorder %s25, %s26
    %p40 = scmp.eq.s32.totalorder %s18, 1
    %p41 = por %p39, %p40
    %p43 = scmp.ne.s32.totalorder %s26, %s42
    %p44 = scmp.eq.s32.totalorder %s18, 0
    %p45 = por %p43, %p44
    %s47 = sadd.s32 %s46, 1
    %p50 = scmp.eq.s32.totalorder %s12, 1
    %p51 = scmp.ne.s32.totalorder %s46, %s48
    %p52 = scmp.eq.s32.totalorder %s12, 0
    %p53 = por %p51, %p52
    %p54 = scmp.ne.s32.totalorder %s46, %s48
    %p55 = scmp.eq.s32.totalorder %s17, 1
    %p56 = por %p54, %p55
    %p57 = scmp.ne.s32.totalorder %s48, %s49
    %p58 = scmp.eq.s32.totalorder %s17, 0
    %p59 = por %p57, %p58
    %p60 = scmp.ne.s32.totalorder %s48, %s49
    %p61 = scmp.eq.s32.totalorder %s18, 1
    %p62 = por %p60, %p61
    %p64 = scmp.ne.s32.totalorder %s49, %s63
    %p65 = scmp.eq.s32.totalorder %s18, 0
    %p66 = por %p64, %p65
    %s68 = sadd.s32 %s67, 1
    %p71 = scmp.eq.s32.totalorder %s12, 1
    %p72 = scmp.ne.s32.totalorder %s67, %s69
    %p73 = scmp.eq.s32.totalorder %s12, 0
    %p74 = por %p72, %p73
    %p75 = scmp.ne.s32.totalorder %s67, %s69
    %p76 = scmp.eq.s32.totalorder %s17, 1
    %p77 = por %p75, %p76
    %p78 = scmp.ne.s32.totalorder %s69, %s70
    %p79 = scmp.eq.s32.totalorder %s17, 0
    %p80 = por %p78, %p79
    %p81 = scmp.ne.s32.totalorder %s69, %s70
    %p82 = scmp.eq.s32.totalorder %s18, 1
    %p83 = por %p81, %p82
    %p85 = scmp.ne.s32.totalorder %s70, %s84
    %p86 = scmp.eq.s32.totalorder %s18, 0
    %p87 = por %p85, %p86
    %s88 = ssub.s32 %s12, %s19
    %p89 = scmp.eq.s32.totalorder %s88, 0
    %s91 = sadd.s32 %s90, 1
    %s92 = scalar_select %p89, %s90, %s91
    %p95 = pneg %p89
    %p96 = scmp.eq.s32.totalorder %s12, 1
    %p97 = por %p95, %p96
    %p98 = scmp.ne.s32.totalorder %s90, %s93
    %p99 = scmp.eq.s32.totalorder %s12, 0
    %p100 = por %p98, %p99
    %p101 = scmp.ne.s32.totalorder %s90, %s93
    %p102 = scmp.eq.s32.totalorder %s17, 1
    %p103 = por %p101, %p102
    %p104 = scmp.ne.s32.totalorder %s93, %s94
    %p105 = scmp.eq.s32.totalorder %s17, 0
    %p106 = por %p104, %p105
    %p107 = scmp.ne.s32.totalorder %s93, %s94
    %p108 = scmp.eq.s32.totalorder %s18, 1
    %p109 = por %p107, %p108
    %p111 = scmp.ne.s32.totalorder %s94, %s110
    %p112 = scmp.eq.s32.totalorder %s18, 0
    %p113 = por %p111, %p112
    %s114 = ssub.s32 %s12, %s19
    %p115 = scmp.eq.s32.totalorder %s114, 0
    %s117 = sadd.s32 %s116, 1
    %s118 = scalar_select %p115, %s116, %s117
    %p121 = pneg %p115
    %p122 = scmp.eq.s32.totalorder %s12, 1
    %p123 = por %p121, %p122
    %p124 = scmp.ne.s32.totalorder %s116, %s119
    %p125 = scmp.eq.s32.totalorder %s12, 0
    %p126 = por %p124, %p125
    %p127 = scmp.ne.s32.totalorder %s116, %s119
    %p128 = scmp.eq.s32.totalorder %s17, 1
    %p129 = por %p127, %p128
    %p130 = scmp.ne.s32.totalorder %s119, %s120
    %p131 = scmp.eq.s32.totalorder %s17, 0
    %p132 = por %p130, %p131
    %p133 = scmp.ne.s32.totalorder %s119, %s120
    %p134 = scmp.eq.s32.totalorder %s18, 1
    %p135 = por %p133, %p134
    %p137 = scmp.ne.s32.totalorder %s120, %s136
    %p138 = scmp.eq.s32.totalorder %s18, 0
    %p139 = por %p137, %p138
    %s140 = ssub.s32 %s12, %s19
    %p141 = scmp.eq.s32.totalorder %s140, 0
    %s143 = sadd.s32 %s142, 1
    %s144 = scalar_select %p141, %s142, %s143
    %p147 = pneg %p141
    %p148 = scmp.eq.s32.totalorder %s12, 1
    %p149 = por %p147, %p148
    %p150 = scmp.ne.s32.totalorder %s142, %s145
    %p151 = scmp.eq.s32.totalorder %s12, 0
    %p152 = por %p150, %p151
    %p153 = scmp.ne.s32.totalorder %s142, %s145
    %p154 = scmp.eq.s32.totalorder %s17, 1
    %p155 = por %p153, %p154
    %p156 = scmp.ne.s32.totalorder %s145, %s146
    %p157 = scmp.eq.s32.totalorder %s17, 0
    %p158 = por %p156, %p157
    %p159 = scmp.ne.s32.totalorder %s145, %s146
    %p160 = scmp.eq.s32.totalorder %s18, 1
    %p161 = por %p159, %p160
    %p163 = scmp.ne.s32.totalorder %s146, %s162
    %p164 = scmp.eq.s32.totalorder %s18, 0
    %p165 = por %p163, %p164
    %p166 = scmp.le.s32.totalorder 1, %s12
    %p167 = scmp.lt.s32.totalorder %s12, 3
    %p168 = pnand %p166, %p167
    %p169 = pneg %p168
    // Predicated region
    $region9: #{vector_quantizer_forward.1} parent=5 // pred_check
      _
    $region10: #{vector_quantizer_forward.1} parent=5 // pred_check_branch
      %171 = sbr.rel (%p168) target = $region12
    $region11: #{vector_quantizer_forward.1} parent=5 // pred_region
      %s172 = ssub.s32 %s12, 1
      // Predicated region
      $region13: #{vector_quantizer_forward.1} parent=11 // pred_check
        %p173 = pneg %p59
      $region14: #{vector_quantizer_forward.1} parent=11 // pred_check_branch
        %175 = sbr.rel (%p173) target = $region16
      $region15: #{vector_quantizer_forward.1} parent=11 // pred_region
        _
      $region16: #{vector_quantizer_forward.1} parent=11 // pred_fallthru
        _
      // Predicated region
      $region17: #{vector_quantizer_forward.1} parent=11 // pred_check
        %p176 = pneg %p80
      $region18: #{vector_quantizer_forward.1} parent=11 // pred_check_branch
        %178 = sbr.rel (%p176) target = $region20
      $region19: #{vector_quantizer_forward.1} parent=11 // pred_region
        _
      $region20: #{vector_quantizer_forward.1} parent=11 // pred_fallthru
        _
    $region12: #{vector_quantizer_forward.1} parent=5 // pred_fallthru
      _
    %p179 = scmp.lt.s32.totalorder %s12, 2
    // Predicated region
    $region21: #{vector_quantizer_forward.1} parent=5 // pred_check
      %p180 = pneg %p179
    $region22: #{vector_quantizer_forward.1} parent=5 // pred_check_branch
      %182 = sbr.rel (%p180) target = $region24
    $region23: #{vector_quantizer_forward.1} parent=5 // pred_region
      // Predicated region
      $region25: #{vector_quantizer_forward.1} parent=23 // pred_check
        %p183 = pneg %p32
      $region26: #{vector_quantizer_forward.1} parent=23 // pred_check_branch
        %185 = sbr.rel (%p183) target = $region28
      $region27: #{vector_quantizer_forward.1} parent=23 // pred_region
        %s186 = smul.u32 2, %s12
        %p187 = scmp.lt.s32.totalorder %s186, 3
        %s188 = scalar_select %p187, %s186, 3
        %s189 = smul.addr %s188, 8
        %s190 = scalar_lea.vmem %s0, %s189
        %s191 = smul.u32 2, %s12
      $region28: #{vector_quantizer_forward.1} parent=23 // pred_fallthru
        _
    $region24: #{vector_quantizer_forward.1} parent=5 // pred_fallthru
      _
    %p192 = scmp.le.s32.totalorder 1, %s12
    %p193 = scmp.lt.s32.totalorder %s12, 3
    %p194 = pnand %p192, %p193
    %p195 = pneg %p194
    // Predicated region
    $region29: #{vector_quantizer_forward.1} parent=5 // pred_check
      _
    $region30: #{vector_quantizer_forward.1} parent=5 // pred_check_branch
      %197 = sbr.rel (%p194) target = $region32
    $region31: #{vector_quantizer_forward.1} parent=5 // pred_region
      %s198 = ssub.s32 %s12, 1
      %s199 = smul.u32 2, %s17
      %p200 = scmp.lt.s32.totalorder %s199, 3
      %s201 = scalar_select %p200, %s199, 3
      %s202 = smul.addr %s201, 8
      %s203 = scalar_lea.vmem %s0, %s202
      %p204 = pneg %p38
      %p205 = pneg %p35
      %p206 = pneg %p59
      %p207 = pneg %p56
      %p208 = pneg %p80
      %p209 = pneg %p77
      %p210 = pneg %p106
      %p211 = pneg %p103
      %s212 = smul.u32 2, %s17
      %p213 = scmp.lt.s32.totalorder %s212, 3
      %s214 = scalar_select %p213, %s212, 3
      %s215 = smul.addr %s214, 8
      %s216 = scalar_lea.vmem %s3, %s215
      %p217 = pneg %p132
      %p218 = pneg %p129
      %s219 = smul.u32 2, %s17
      %p220 = scmp.lt.s32.totalorder %s219, 3
      %s221 = scalar_select %p220, %s219, 3
      %s222 = scalar_lea.vmem %s4, %s221
      %p223 = pneg %p158
      %p224 = pneg %p155
      %p225 = scmp.lt.s32.totalorder %s17, 1
      %s226 = scalar_select %p225, %s17, 1
      %s227 = scalar_lea.vmem %s5, %s226
      %s228 = smul.u32 2, %s17
      %p229 = scmp.lt.s32.totalorder %s228, 3
      %s230 = scalar_select %p229, %s228, 3
      %s231 = smul.addr %s230, 8
      %s232 = scalar_lea.vmem %s0, %s231
      %s233 = smul.u32 2, %s17
      %s234 = smul.u32 2, %s17
      %p235 = scmp.lt.s32.totalorder %s234, 3
      %s236 = scalar_select %p235, %s234, 3
      %s237 = smul.addr %s236, 8
      %s238 = scalar_lea.vmem %s3, %s237
      %s239 = smul.u32 2, %s17
      %s240 = smul.u32 2, %s17
      %p241 = scmp.lt.s32.totalorder %s240, 3
      %s242 = scalar_select %p241, %s240, 3
      %s243 = scalar_lea.vmem %s4, %s242
      %s244 = smul.u32 2, %s17
      %p245 = scmp.lt.s32.totalorder %s17, 1
      %s246 = scalar_select %p245, %s17, 1
      %s247 = scalar_lea.vmem %s5, %s246
      %v248 = vld [vmem:[%s232] sm:$0xff]
      %v249 = vld [vmem:[%s232 + $0x8] sm:$0xff]
      %v250 = vld [vmem:[%s1] sm:$0xff]
      %251 = vxpose.xlu0.b32.start [1/16] %v250, 128
      %252 = vxpose.xlu0.b32.cont [2/16] 0.0, 128
      %253 = vxpose.xlu0.b32.cont [3/16] 0.0, 128
      %254 = vxpose.xlu0.b32.cont [4/16] 0.0, 128
      %255 = vxpose.xlu0.b32.cont [5/16] 0.0, 128
      %256 = vxpose.xlu0.b32.cont [6/16] 0.0, 128
      %257 = vxpose.xlu0.b32.cont [7/16] 0.0, 128
      %258 = vxpose.xlu0.b32.cont [8/16] 0.0, 128
      %259 = vxpose.xlu0.b32.cont [9/16] 0.0, 128
      %260 = vxpose.xlu0.b32.cont [10/16] 0.0, 128
      %261 = vxpose.xlu0.b32.cont [11/16] 0.0, 128
      %262 = vxpose.xlu0.b32.cont [12/16] 0.0, 128
      %263 = vxpose.xlu0.b32.cont [13/16] 0.0, 128
      %264 = vxpose.xlu0.b32.cont [14/16] 0.0, 128
      %265 = vxpose.xlu0.b32.cont [15/16] 0.0, 128
      %266 = vxpose.xlu0.b32.end [16/16] 0.0, 128
      %v267 = vpop.trf.xlu0
      %v268 = vpop.trf.xlu0
      %v269 = vpop.trf.xlu0
      %v270 = vpop.trf.xlu0
      %v271 = vpop.trf.xlu0
      %v272 = vpop.trf.xlu0
      %v273 = vpop.trf.xlu0
      %v274 = vpop.trf.xlu0
      %v275 = vpop.trf.xlu0
      %v276 = vpop.trf.xlu0
      %v277 = vpop.trf.xlu0
      %v278 = vpop.trf.xlu0
      %v279 = vpop.trf.xlu0
      %v280 = vpop.trf.xlu0
      %v281 = vpop.trf.xlu0
      %v282 = vpop.trf.xlu0
      %vm283 = vcmask 64512
      %v285 = vsel %vm283, %v267, 0
      %v288 = vsel %vm283, %v268, 0
      %v291 = vsel %vm283, %v269, 0
      %v294 = vsel %vm283, %v270, 0
      %v297 = vsel %vm283, %v271, 0
      %v300 = vsel %vm283, %v272, 0
      %v303 = vsel %vm283, %v273, 0
      %v306 = vsel %vm283, %v274, 0
      %v309 = vsel %vm283, %v275, 0
      %v312 = vsel %vm283, %v276, 0
      %v315 = vsel %vm283, %v277, 0
      %v318 = vsel %vm283, %v278, 0
      %v321 = vsel %vm283, %v279, 0
      %v324 = vsel %vm283, %v280, 0
      %v327 = vsel %vm283, %v281, 0
      %v330 = vsel %vm283, %v282, 0
      %332 = vmatprep.subr.mxu0 0.0
      %333 = vmatpush1.msra.mxu0 0.0
      %334 = vmatprep.subr.mxu0 0.0
      %335 = vmatpush1.msra.mxu0 0.0
      %336 = vmatprep.subr.mxu0 0.0
      %337 = vmatpush1.msra.mxu0 0.0
      %338 = vmatprep.subr.mxu0 0.0
      %339 = vmatpush1.msra.mxu0 0.0
      %340 = vmatprep.subr.mxu0 0.0
      %341 = vmatpush1.msra.mxu0 0.0
      %342 = vmatprep.subr.mxu0 0.0
      %343 = vmatpush1.msra.mxu0 0.0
      %344 = vmatprep.subr.mxu0 0.0
      %345 = vmatpush1.msra.mxu0 0.0
      %346 = vmatprep.subr.mxu0 0.0
      %347 = vmatpush1.msra.mxu0 0.0
      %348 = vmatprep.subr.mxu0 0.0
      %349 = vmatpush1.msra.mxu0 0.0
      %350 = vmatprep.subr.mxu0 0.0
      %351 = vmatpush1.msra.mxu0 0.0
      %352 = vmatprep.subr.mxu0 0.0
      %353 = vmatpush1.msra.mxu0 0.0
      %354 = vmatprep.subr.mxu0 0.0
      %355 = vmatpush1.msra.mxu0 0.0
      %356 = vmatprep.subr.mxu0 0.0
      %357 = vmatpush1.msra.mxu0 0.0
      %358 = vmatprep.subr.mxu0 0.0
      %359 = vmatpush1.msra.mxu0 0.0
      %360 = vmatprep.subr.mxu0 0.0
      %361 = vmatpush1.msra.mxu0 0.0
      %362 = vmatprep.subr.mxu0 %v249
      %363 = vmatpush1.msra.mxu0 %v248
      %364 = vmatprep.subr.mxu0 0.0
      %365 = vmatpush2.msra.mxu0 0.0
      %366 = vmatprep.subr.mxu0 0.0
      %367 = vmatpush2.msra.mxu0 0.0
      %368 = vmatprep.subr.mxu0 0.0
      %369 = vmatpush2.msra.mxu0 0.0
      %370 = vmatprep.subr.mxu0 0.0
      %371 = vmatpush2.msra.mxu0 0.0
      %372 = vmatprep.subr.mxu0 0.0
      %373 = vmatpush2.msra.mxu0 0.0
      %374 = vmatprep.subr.mxu0 0.0
      %375 = vmatpush2.msra.mxu0 0.0
      %376 = vmatprep.subr.mxu0 0.0
      %377 = vmatpush2.msra.mxu0 0.0
      %378 = vmatprep.subr.mxu0 0.0
      %379 = vmatpush2.msra.mxu0 0.0
      %380 = vmatprep.subr.mxu0 0.0
      %381 = vmatpush2.msra.mxu0 0.0
      %382 = vmatprep.subr.mxu0 0.0
      %383 = vmatpush2.msra.mxu0 0.0
      %384 = vmatprep.subr.mxu0 0.0
      %385 = vmatpush2.msra.mxu0 0.0
      %386 = vmatprep.subr.mxu0 0.0
      %387 = vmatpush2.msra.mxu0 0.0
      %388 = vmatprep.subr.mxu0 0.0
      %389 = vmatpush2.msra.mxu0 0.0
      %390 = vmatprep.subr.mxu0 0.0
      %391 = vmatpush2.msra.mxu0 0.0
      %392 = vmatprep.subr.mxu0 0.0
      %393 = vmatpush2.msra.mxu0 0.0
      %394 = vmatprep.subr.mxu0 0.0
      %395 = vmatpush2.msra.mxu0 0.0
      %396 = vmatprep.mubr.f32.mxu0 0.0
      %397 = vmatmul.mubr.f32.gmra.mxu0 %v285
      %v398 = vpop.f32.mrf.mxu0
      %v399 = vadd.f32 0.0, %v398
      %v400 = vpop.f32.mrf.mxu0
      %v401 = vadd.f32 0.0, %v400
      %402 = vmatprep.mubr.f32.mxu0 0.0
      %403 = vmatmul.mubr.f32.gmra.mxu0 %v288
      %v404 = vpop.f32.mrf.mxu0
      %v405 = vadd.f32 0.0, %v404
      %v406 = vpop.f32.mrf.mxu0
      %v407 = vadd.f32 0.0, %v406
      %408 = vmatprep.mubr.f32.mxu0 0.0
      %409 = vmatmul.mubr.f32.gmra.mxu0 %v291
      %v410 = vpop.f32.mrf.mxu0
      %v411 = vadd.f32 0.0, %v410
      %v412 = vpop.f32.mrf.mxu0
      %v413 = vadd.f32 0.0, %v412
      %414 = vmatprep.mubr.f32.mxu0 0.0
      %415 = vmatmul.mubr.f32.gmra.mxu0 %v294
      %v416 = vpop.f32.mrf.mxu0
      %v417 = vadd.f32 0.0, %v416
      %v418 = vpop.f32.mrf.mxu0
      %v419 = vadd.f32 0.0, %v418
      %420 = vmatprep.mubr.f32.mxu0 0.0
      %421 = vmatmul.mubr.f32.gmra.mxu0 %v297
      %v422 = vpop.f32.mrf.mxu0
      %v423 = vadd.f32 0.0, %v422
      %v424 = vpop.f32.mrf.mxu0
      %v425 = vadd.f32 0.0, %v424
      %426 = vmatprep.mubr.f32.mxu0 0.0
      %427 = vmatmul.mubr.f32.gmra.mxu0 %v300
      %v428 = vpop.f32.mrf.mxu0
      %v429 = vadd.f32 0.0, %v428
      %v430 = vpop.f32.mrf.mxu0
      %v431 = vadd.f32 0.0, %v430
      %432 = vmatprep.mubr.f32.mxu0 0.0
      %433 = vmatmul.mubr.f32.gmra.mxu0 %v303
      %v434 = vpop.f32.mrf.mxu0
      %v435 = vadd.f32 0.0, %v434
      %v436 = vpop.f32.mrf.mxu0
      %v437 = vadd.f32 0.0, %v436
      %438 = vmatprep.mubr.f32.mxu0 0.0
      %439 = vmatmul.mubr.f32.gmra.mxu0 %v306
      %v440 = vpop.f32.mrf.mxu0
      %v441 = vadd.f32 0.0, %v440
      %v442 = vpop.f32.mrf.mxu0
      %v443 = vadd.f32 0.0, %v442
      %444 = vmatprep.mubr.f32.mxu0 0.0
      %445 = vmatmul.mubr.f32.gmra.mxu0 %v309
      %v446 = vpop.f32.mrf.mxu0
      %v447 = vadd.f32 0.0, %v446
      %v448 = vpop.f32.mrf.mxu0
      %v449 = vadd.f32 0.0, %v448
      %450 = vmatprep.mubr.f32.mxu0 0.0
      %451 = vmatmul.mubr.f32.gmra.mxu0 %v312
      %v452 = vpop.f32.mrf.mxu0
      %v453 = vadd.f32 0.0, %v452
      %v454 = vpop.f32.mrf.mxu0
      %v455 = vadd.f32 0.0, %v454
      %456 = vmatprep.mubr.f32.mxu0 0.0
      %457 = vmatmul.mubr.f32.gmra.mxu0 %v315
      %v458 = vpop.f32.mrf.mxu0
      %v459 = vadd.f32 0.0, %v458
      %v460 = vpop.f32.mrf.mxu0
      %v461 = vadd.f32 0.0, %v460
      %462 = vmatprep.mubr.f32.mxu0 0.0
      %463 = vmatmul.mubr.f32.gmra.mxu0 %v318
      %v464 = vpop.f32.mrf.mxu0
      %v465 = vadd.f32 0.0, %v464
      %v466 = vpop.f32.mrf.mxu0
      %v467 = vadd.f32 0.0, %v466
      %468 = vmatprep.mubr.f32.mxu0 0.0
      %469 = vmatmul.mubr.f32.gmra.mxu0 %v321
      %v470 = vpop.f32.mrf.mxu0
      %v471 = vadd.f32 0.0, %v470
      %v472 = vpop.f32.mrf.mxu0
      %v473 = vadd.f32 0.0, %v472
      %474 = vmatprep.mubr.f32.mxu0 0.0
      %475 = vmatmul.mubr.f32.gmra.mxu0 %v324
      %v476 = vpop.f32.mrf.mxu0
      %v477 = vadd.f32 0.0, %v476
      %v478 = vpop.f32.mrf.mxu0
      %v479 = vadd.f32 0.0, %v478
      %480 = vmatprep.mubr.f32.mxu0 0.0
      %481 = vmatmul.mubr.f32.gmra.mxu0 %v327
      %v482 = vpop.f32.mrf.mxu0
      %v483 = vadd.f32 0.0, %v482
      %v484 = vpop.f32.mrf.mxu0
      %v485 = vadd.f32 0.0, %v484
      %486 = vmatprep.mubr.f32.mxu0 0.0
      %487 = vmatmul.mubr.f32.gmra.mxu0 %v330
      %v488 = vpop.f32.mrf.mxu0
      %v489 = vadd.f32 0.0, %v488
      %v490 = vpop.f32.mrf.mxu0
      %v491 = vadd.f32 0.0, %v490
      %492 = vdwg.mxu0
      %v493 = vld [vmem:[%s2] sm:$0xff]
      %v494 = vld [vmem:[%s2 + $0x8] sm:$0xff]
      %v495 = vld [vmem:[%s2 + $0x10] sm:$0xff]
      %v496 = vld [vmem:[%s2 + $0x18] sm:$0xff]
      %v497 = vld [vmem:[%s2 + $0x20] sm:$0xff]
      %v498 = vld [vmem:[%s2 + $0x28] sm:$0xff]
      %v499 = vld [vmem:[%s2 + $0x30] sm:$0xff]
      %v500 = vld [vmem:[%s2 + $0x38] sm:$0xff]
      %v501 = vld [vmem:[%s2 + $0x40] sm:$0xff]
      %v502 = vld [vmem:[%s2 + $0x48] sm:$0xff]
      %v503 = vld [vmem:[%s2 + $0x50] sm:$0xff]
      %v504 = vld [vmem:[%s2 + $0x58] sm:$0xff]
      %v505 = vld [vmem:[%s2 + $0x60] sm:$0xff]
      %v506 = vld [vmem:[%s2 + $0x68] sm:$0xff]
      %v507 = vld [vmem:[%s2 + $0x70] sm:$0xff]
      %v508 = vld [vmem:[%s2 + $0x78] sm:$0xff]
      %v509 = vmul.f32 %v399, 2.0
      %v510 = vmul.f32 %v401, 2.0
      %v511 = vmul.f32 %v405, 2.0
      %v512 = vmul.f32 %v407, 2.0
      %v513 = vmul.f32 %v411, 2.0
      %v514 = vmul.f32 %v413, 2.0
      %v515 = vmul.f32 %v417, 2.0
      %v516 = vmul.f32 %v419, 2.0
      %v517 = vmul.f32 %v423, 2.0
      %v518 = vmul.f32 %v425, 2.0
      %v519 = vmul.f32 %v429, 2.0
      %v520 = vmul.f32 %v431, 2.0
      %v521 = vmul.f32 %v435, 2.0
      %v522 = vmul.f32 %v437, 2.0
      %v523 = vmul.f32 %v441, 2.0
      %v524 = vmul.f32 %v443, 2.0
      %v525 = vmul.f32 %v447, 2.0
      %v526 = vmul.f32 %v449, 2.0
      %v527 = vmul.f32 %v453, 2.0
      %v528 = vmul.f32 %v455, 2.0
      %v529 = vmul.f32 %v459, 2.0
      %v530 = vmul.f32 %v461, 2.0
      %v531 = vmul.f32 %v465, 2.0
      %v532 = vmul.f32 %v467, 2.0
      %v533 = vmul.f32 %v471, 2.0
      %v534 = vmul.f32 %v473, 2.0
      %v535 = vmul.f32 %v477, 2.0
      %v536 = vmul.f32 %v479, 2.0
      %v537 = vmul.f32 %v483, 2.0
      %v538 = vmul.f32 %v485, 2.0
      %v539 = vmul.f32 %v489, 2.0
      %v540 = vmul.f32 %v491, 2.0
      %542 = vset.pattern.permute.xlu0 0
      %543 = vperm.xlu0 %542, %v493
      %v544 = vpop.permute.xlu0 %543
      %547 = vset.pattern.permute.xlu0 0
      %548 = vperm.xlu0 %547, %v494
      %v549 = vpop.permute.xlu0 %548
      %552 = vset.pattern.permute.xlu0 0
      %553 = vperm.xlu0 %552, %v495
      %v554 = vpop.permute.xlu0 %553
      %557 = vset.pattern.permute.xlu0 0
      %558 = vperm.xlu0 %557, %v496
      %v559 = vpop.permute.xlu0 %558
      %562 = vset.pattern.permute.xlu0 0
      %563 = vperm.xlu0 %562, %v497
      %v564 = vpop.permute.xlu0 %563
      %567 = vset.pattern.permute.xlu0 0
      %568 = vperm.xlu0 %567, %v498
      %v569 = vpop.permute.xlu0 %568
      %572 = vset.pattern.permute.xlu0 0
      %573 = vperm.xlu0 %572, %v499
      %v574 = vpop.permute.xlu0 %573
      %577 = vset.pattern.permute.xlu0 0
      %578 = vperm.xlu0 %577, %v500
      %v579 = vpop.permute.xlu0 %578
      %582 = vset.pattern.permute.xlu0 0
      %583 = vperm.xlu0 %582, %v501
      %v584 = vpop.permute.xlu0 %583
      %587 = vset.pattern.permute.xlu0 0
      %588 = vperm.xlu0 %587, %v502
      %v589 = vpop.permute.xlu0 %588
      %592 = vset.pattern.permute.xlu0 0
      %593 = vperm.xlu0 %592, %v503
      %v594 = vpop.permute.xlu0 %593
      %597 = vset.pattern.permute.xlu0 0
      %598 = vperm.xlu0 %597, %v504
      %v599 = vpop.permute.xlu0 %598
      %602 = vset.pattern.permute.xlu0 0
      %603 = vperm.xlu0 %602, %v505
      %v604 = vpop.permute.xlu0 %603
      %607 = vset.pattern.permute.xlu0 0
      %608 = vperm.xlu0 %607, %v506
      %v609 = vpop.permute.xlu0 %608
      %612 = vset.pattern.permute.xlu0 0
      %613 = vperm.xlu0 %612, %v507
      %v614 = vpop.permute.xlu0 %613
      %617 = vset.pattern.permute.xlu0 0
      %618 = vperm.xlu0 %617, %v508
      %v619 = vpop.permute.xlu0 %618
      %v621 = vsub.f32 %v544, %v509
      %v622 = vsub.f32 %v544, %v510
      %v623 = vsub.f32 %v549, %v511
      %v624 = vsub.f32 %v549, %v512
      %v625 = vsub.f32 %v554, %v513
      %v626 = vsub.f32 %v554, %v514
      %v627 = vsub.f32 %v559, %v515
      %v628 = vsub.f32 %v559, %v516
      %v629 = vsub.f32 %v564, %v517
      %v630 = vsub.f32 %v564, %v518
      %v631 = vsub.f32 %v569, %v519
      %v632 = vsub.f32 %v569, %v520
      %v633 = vsub.f32 %v574, %v521
      %v634 = vsub.f32 %v574, %v522
      %v635 = vsub.f32 %v579, %v523
      %v636 = vsub.f32 %v579, %v524
      %v637 = vsub.f32 %v584, %v525
      %v638 = vsub.f32 %v584, %v526
      %v639 = vsub.f32 %v589, %v527
      %v640 = vsub.f32 %v589, %v528
      %v641 = vsub.f32 %v594, %v529
      %v642 = vsub.f32 %v594, %v530
      %v643 = vsub.f32 %v599, %v531
      %v644 = vsub.f32 %v599, %v532
      %v645 = vsub.f32 %v604, %v533
      %v646 = vsub.f32 %v604, %v534
      %v647 = vsub.f32 %v609, %v535
      %v648 = vsub.f32 %v609, %v536
      %v649 = vsub.f32 %v614, %v537
      %v650 = vsub.f32 %v614, %v538
      %v651 = vsub.f32 %v619, %v539
      %v652 = vsub.f32 %v619, %v540
      %v653 = vmin.f32 %v621, %v625
      %v654 = vmin.f32 %v623, %v627
      %v655 = vmin.f32 %v653, %v629
      %v656 = vmin.f32 %v654, %v631
      %v657 = vmin.f32 %v655, %v633
      %v658 = vmin.f32 %v656, %v635
      %v659 = vmin.f32 %v657, %v637
      %v660 = vmin.f32 %v658, %v639
      %v661 = vmin.f32 %v659, %v641
      %v662 = vmin.f32 %v660, %v643
      %v663 = vmin.f32 %v661, %v645
      %v664 = vmin.f32 %v662, %v647
      %v665 = vmin.f32 %v663, %v649
      %v666 = vmin.f32 %v664, %v651
      %v667 = vmin.f32 %v665, %v666
      %v668 = vrot.slane %v667, 4
      %v669 = vmin.f32 %v667, %v668
      %v670 = vrot.slane %v669, 2
      %v671 = vmin.f32 %v669, %v670
      %v672 = vrot.slane %v671, 1
      %v673 = vmin.f32 %v671, %v672
      %v674 = vmin.f32 %v622, %v626
      %v675 = vmin.f32 %v624, %v628
      %v676 = vmin.f32 %v674, %v630
      %v677 = vmin.f32 %v675, %v632
      %v678 = vmin.f32 %v676, %v634
      %v679 = vmin.f32 %v677, %v636
      %v680 = vmin.f32 %v678, %v638
      %v681 = vmin.f32 %v679, %v640
      %v682 = vmin.f32 %v680, %v642
      %v683 = vmin.f32 %v681, %v644
      %v684 = vmin.f32 %v682, %v646
      %v685 = vmin.f32 %v683, %v648
      %v686 = vmin.f32 %v684, %v650
      %v687 = vmin.f32 %v685, %v652
      %v688 = vmin.f32 %v686, %v687
      %v689 = vrot.slane %v688, 4
      %v690 = vmin.f32 %v688, %v689
      %v691 = vrot.slane %v690, 2
      %v692 = vmin.f32 %v690, %v691
      %v693 = vrot.slane %v692, 1
      %v694 = vmin.f32 %v692, %v693
      %v695 = vlaneseq
      %v696 = vshrl.u32 %v695, 7
      %v697 = vadd.s32 %v696, 8
      %v698 = vadd.s32 %v696, 16
      %v699 = vadd.s32 %v696, 24
      %v700 = vadd.s32 %v696, 32
      %v701 = vadd.s32 %v696, 40
      %v702 = vadd.s32 %v696, 48
      %v703 = vadd.s32 %v696, 56
      %v704 = vadd.s32 %v696, 64
      %v705 = vadd.s32 %v696, 72
      %v706 = vadd.s32 %v696, 80
      %v707 = vadd.s32 %v696, 88
      %v708 = vadd.s32 %v696, 96
      %v709 = vadd.s32 %v696, 104
      %v710 = vadd.s32 %v696, 112
      %v711 = vadd.s32 %v696, 120
      %vm712 = vcmp.eq.f32.partialorder %v621, %v673
      %vm713 = vcmp.eq.f32.partialorder %v622, %v694
      %vm714 = vcmp.eq.f32.partialorder %v623, %v673
      %vm715 = vcmp.eq.f32.partialorder %v624, %v694
      %vm716 = vcmp.eq.f32.partialorder %v625, %v673
      %vm717 = vcmp.eq.f32.partialorder %v626, %v694
      %vm718 = vcmp.eq.f32.partialorder %v627, %v673
      %vm719 = vcmp.eq.f32.partialorder %v628, %v694
      %vm720 = vcmp.eq.f32.partialorder %v629, %v673
      %vm721 = vcmp.eq.f32.partialorder %v630, %v694
      %vm722 = vcmp.eq.f32.partialorder %v631, %v673
      %vm723 = vcmp.eq.f32.partialorder %v632, %v694
      %vm724 = vcmp.eq.f32.partialorder %v633, %v673
      %vm725 = vcmp.eq.f32.partialorder %v634, %v694
      %vm726 = vcmp.eq.f32.partialorder %v635, %v673
      %vm727 = vcmp.eq.f32.partialorder %v636, %v694
      %vm728 = vcmp.eq.f32.partialorder %v637, %v673
      %vm729 = vcmp.eq.f32.partialorder %v638, %v694
      %vm730 = vcmp.eq.f32.partialorder %v639, %v673
      %vm731 = vcmp.eq.f32.partialorder %v640, %v694
      %vm732 = vcmp.eq.f32.partialorder %v641, %v673
      %vm733 = vcmp.eq.f32.partialorder %v642, %v694
      %vm734 = vcmp.eq.f32.partialorder %v643, %v673
      %vm735 = vcmp.eq.f32.partialorder %v644, %v694
      %vm736 = vcmp.eq.f32.partialorder %v645, %v673
      %vm737 = vcmp.eq.f32.partialorder %v646, %v694
      %vm738 = vcmp.eq.f32.partialorder %v647, %v673
      %vm739 = vcmp.eq.f32.partialorder %v648, %v694
      %vm740 = vcmp.eq.f32.partialorder %v649, %v673
      %vm741 = vcmp.eq.f32.partialorder %v650, %v694
      %vm742 = vcmp.eq.f32.partialorder %v651, %v673
      %vm743 = vcmp.eq.f32.partialorder %v652, %v694
      %v744 = vsel %vm712, %v696, 128
      %v745 = vsel %vm713, %v696, 128
      %v746 = vsel %vm714, %v697, 128
      %v747 = vsel %vm715, %v697, 128
      %v748 = vsel %vm716, %v698, 128
      %v749 = vsel %vm717, %v698, 128
      %v750 = vsel %vm718, %v699, 128
      %v751 = vsel %vm719, %v699, 128
      %v752 = vsel %vm720, %v700, 128
      %v753 = vsel %vm721, %v700, 128
      %v754 = vsel %vm722, %v701, 128
      %v755 = vsel %vm723, %v701, 128
      %v756 = vsel %vm724, %v702, 128
      %v757 = vsel %vm725, %v702, 128
      %v758 = vsel %vm726, %v703, 128
      %v759 = vsel %vm727, %v703, 128
      %v760 = vsel %vm728, %v704, 128
      %v761 = vsel %vm729, %v704, 128
      %v762 = vsel %vm730, %v705, 128
      %v763 = vsel %vm731, %v705, 128
      %v764 = vsel %vm732, %v706, 128
      %v765 = vsel %vm733, %v706, 128
      %v766 = vsel %vm734, %v707, 128
      %v767 = vsel %vm735, %v707, 128
      %v768 = vsel %vm736, %v708, 128
      %v769 = vsel %vm737, %v708, 128
      %v770 = vsel %vm738, %v709, 128
      %v771 = vsel %vm739, %v709, 128
      %v772 = vsel %vm740, %v710, 128
      %v773 = vsel %vm741, %v710, 128
      %v774 = vsel %vm742, %v711, 128
      %v775 = vsel %vm743, %v711, 128
      %vm776 = vcmp.lt.s32.totalorder %v744, %v748
      %v777 = vsel %vm776, %v744, %v748
      %vm778 = vcmp.lt.s32.totalorder %v746, %v750
      %v779 = vsel %vm778, %v746, %v750
      %vm780 = vcmp.lt.s32.totalorder %v777, %v752
      %v781 = vsel %vm780, %v777, %v752
      %vm782 = vcmp.lt.s32.totalorder %v779, %v754
      %v783 = vsel %vm782, %v779, %v754
      %vm784 = vcmp.lt.s32.totalorder %v781, %v756
      %v785 = vsel %vm784, %v781, %v756
      %vm786 = vcmp.lt.s32.totalorder %v783, %v758
      %v787 = vsel %vm786, %v783, %v758
      %vm788 = vcmp.lt.s32.totalorder %v785, %v760
      %v789 = vsel %vm788, %v785, %v760
      %vm790 = vcmp.lt.s32.totalorder %v787, %v762
      %v791 = vsel %vm790, %v787, %v762
      %vm792 = vcmp.lt.s32.totalorder %v789, %v764
      %v793 = vsel %vm792, %v789, %v764
      %vm794 = vcmp.lt.s32.totalorder %v791, %v766
      %v795 = vsel %vm794, %v791, %v766
      %vm796 = vcmp.lt.s32.totalorder %v793, %v768
      %v797 = vsel %vm796, %v793, %v768
      %vm798 = vcmp.lt.s32.totalorder %v795, %v770
      %v799 = vsel %vm798, %v795, %v770
      %vm800 = vcmp.lt.s32.totalorder %v797, %v772
      %v801 = vsel %vm800, %v797, %v772
      %vm802 = vcmp.lt.s32.totalorder %v799, %v774
      %v803 = vsel %vm802, %v799, %v774
      %vm804 = vcmp.lt.s32.totalorder %v801, %v803
      %v805 = vsel %vm804, %v801, %v803
      %v806 = vrot.slane %v805, 4
      %vm807 = vcmp.lt.s32.totalorder %v805, %v806
      %v808 = vsel %vm807, %v805, %v806
      %v809 = vrot.slane %v808, 2
      %vm810 = vcmp.lt.s32.totalorder %v808, %v809
      %v811 = vsel %vm810, %v808, %v809
      %v812 = vrot.slane %v811, 1
      %vm813 = vcmp.lt.s32.totalorder %v811, %v812
      %v814 = vsel %vm813, %v811, %v812
      %vm815 = vcmp.lt.s32.totalorder %v745, %v749
      %v816 = vsel %vm815, %v745, %v749
      %vm817 = vcmp.lt.s32.totalorder %v747, %v751
      %v818 = vsel %vm817, %v747, %v751
      %vm819 = vcmp.lt.s32.totalorder %v816, %v753
      %v820 = vsel %vm819, %v816, %v753
      %vm821 = vcmp.lt.s32.totalorder %v818, %v755
      %v822 = vsel %vm821, %v818, %v755
      %vm823 = vcmp.lt.s32.totalorder %v820, %v757
      %v824 = vsel %vm823, %v820, %v757
      %vm825 = vcmp.lt.s32.totalorder %v822, %v759
      %v826 = vsel %vm825, %v822, %v759
      %vm827 = vcmp.lt.s32.totalorder %v824, %v761
      %v828 = vsel %vm827, %v824, %v761
      %vm829 = vcmp.lt.s32.totalorder %v826, %v763
      %v830 = vsel %vm829, %v826, %v763
      %vm831 = vcmp.lt.s32.totalorder %v828, %v765
      %v832 = vsel %vm831, %v828, %v765
      %vm833 = vcmp.lt.s32.totalorder %v830, %v767
      %v834 = vsel %vm833, %v830, %v767
      %vm835 = vcmp.lt.s32.totalorder %v832, %v769
      %v836 = vsel %vm835, %v832, %v769
      %vm837 = vcmp.lt.s32.totalorder %v834, %v771
      %v838 = vsel %vm837, %v834, %v771
      %vm839 = vcmp.lt.s32.totalorder %v836, %v773
      %v840 = vsel %vm839, %v836, %v773
      %vm841 = vcmp.lt.s32.totalorder %v838, %v775
      %v842 = vsel %vm841, %v838, %v775
      %vm843 = vcmp.lt.s32.totalorder %v840, %v842
      %v844 = vsel %vm843, %v840, %v842
      %v845 = vrot.slane %v844, 4
      %vm846 = vcmp.lt.s32.totalorder %v844, %v845
      %v847 = vsel %vm846, %v844, %v845
      %v848 = vrot.slane %v847, 2
      %vm849 = vcmp.lt.s32.totalorder %v847, %v848
      %v850 = vsel %vm849, %v847, %v848
      %v851 = vrot.slane %v850, 1
      %vm852 = vcmp.lt.s32.totalorder %v850, %v851
      %v853 = vsel %vm852, %v850, %v851
      %vm854 = vcmp.eq.s32.totalorder %v696, %v814
      %vm855 = vcmp.eq.s32.totalorder %v696, %v853
      %vm856 = vcmp.eq.s32.totalorder %v697, %v814
      %vm857 = vcmp.eq.s32.totalorder %v697, %v853
      %vm858 = vcmp.eq.s32.totalorder %v698, %v814
      %vm859 = vcmp.eq.s32.totalorder %v698, %v853
      %vm860 = vcmp.eq.s32.totalorder %v699, %v814
      %vm861 = vcmp.eq.s32.totalorder %v699, %v853
      %vm862 = vcmp.eq.s32.totalorder %v700, %v814
      %vm863 = vcmp.eq.s32.totalorder %v700, %v853
      %vm864 = vcmp.eq.s32.totalorder %v701, %v814
      %vm865 = vcmp.eq.s32.totalorder %v701, %v853
      %vm866 = vcmp.eq.s32.totalorder %v702, %v814
      %vm867 = vcmp.eq.s32.totalorder %v702, %v853
      %vm868 = vcmp.eq.s32.totalorder %v703, %v814
      %vm869 = vcmp.eq.s32.totalorder %v703, %v853
      %vm870 = vcmp.eq.s32.totalorder %v704, %v814
      %vm871 = vcmp.eq.s32.totalorder %v704, %v853
      %vm872 = vcmp.eq.s32.totalorder %v705, %v814
      %vm873 = vcmp.eq.s32.totalorder %v705, %v853
      %vm874 = vcmp.eq.s32.totalorder %v706, %v814
      %vm875 = vcmp.eq.s32.totalorder %v706, %v853
      %vm876 = vcmp.eq.s32.totalorder %v707, %v814
      %vm877 = vcmp.eq.s32.totalorder %v707, %v853
      %vm878 = vcmp.eq.s32.totalorder %v708, %v814
      %vm879 = vcmp.eq.s32.totalorder %v708, %v853
      %vm880 = vcmp.eq.s32.totalorder %v709, %v814
      %vm881 = vcmp.eq.s32.totalorder %v709, %v853
      %vm882 = vcmp.eq.s32.totalorder %v710, %v814
      %vm883 = vcmp.eq.s32.totalorder %v710, %v853
      %vm884 = vcmp.eq.s32.totalorder %v711, %v814
      %vm885 = vcmp.eq.s32.totalorder %v711, %v853
      %v886 = vsel %vm854, 1, 0
      %v887 = vsel %vm855, 1, 0
      %v888 = vsel %vm856, 1, 0
      %v889 = vsel %vm857, 1, 0
      %v890 = vsel %vm858, 1, 0
      %v891 = vsel %vm859, 1, 0
      %v892 = vsel %vm860, 1, 0
      %v893 = vsel %vm861, 1, 0
      %v894 = vsel %vm862, 1, 0
      %v895 = vsel %vm863, 1, 0
      %v896 = vsel %vm864, 1, 0
      %v897 = vsel %vm865, 1, 0
      %v898 = vsel %vm866, 1, 0
      %v899 = vsel %vm867, 1, 0
      %v900 = vsel %vm868, 1, 0
      %v901 = vsel %vm869, 1, 0
      %v902 = vsel %vm870, 1, 0
      %v903 = vsel %vm871, 1, 0
      %v904 = vsel %vm872, 1, 0
      %v905 = vsel %vm873, 1, 0
      %v906 = vsel %vm874, 1, 0
      %v907 = vsel %vm875, 1, 0
      %v908 = vsel %vm876, 1, 0
      %v909 = vsel %vm877, 1, 0
      %v910 = vsel %vm878, 1, 0
      %v911 = vsel %vm879, 1, 0
      %v912 = vsel %vm880, 1, 0
      %v913 = vsel %vm881, 1, 0
      %v914 = vsel %vm882, 1, 0
      %v915 = vsel %vm883, 1, 0
      %v916 = vsel %vm884, 1, 0
      %v917 = vsel %vm885, 1, 0
      %v918 = vcvt.s32.f32 %v886
      %v919 = vcvt.s32.f32 %v887
      %v920 = vcvt.s32.f32 %v888
      %v921 = vcvt.s32.f32 %v889
      %v922 = vcvt.s32.f32 %v890
      %v923 = vcvt.s32.f32 %v891
      %v924 = vcvt.s32.f32 %v892
      %v925 = vcvt.s32.f32 %v893
      %v926 = vcvt.s32.f32 %v894
      %v927 = vcvt.s32.f32 %v895
      %v928 = vcvt.s32.f32 %v896
      %v929 = vcvt.s32.f32 %v897
      %v930 = vcvt.s32.f32 %v898
      %v931 = vcvt.s32.f32 %v899
      %v932 = vcvt.s32.f32 %v900
      %v933 = vcvt.s32.f32 %v901
      %v934 = vcvt.s32.f32 %v902
      %v935 = vcvt.s32.f32 %v903
      %v936 = vcvt.s32.f32 %v904
      %v937 = vcvt.s32.f32 %v905
      %v938 = vcvt.s32.f32 %v906
      %v939 = vcvt.s32.f32 %v907
      %v940 = vcvt.s32.f32 %v908
      %v941 = vcvt.s32.f32 %v909
      %v942 = vcvt.s32.f32 %v910
      %v943 = vcvt.s32.f32 %v911
      %v944 = vcvt.s32.f32 %v912
      %v945 = vcvt.s32.f32 %v913
      %v946 = vcvt.s32.f32 %v914
      %v947 = vcvt.s32.f32 %v915
      %v948 = vcvt.s32.f32 %v916
      %v949 = vcvt.s32.f32 %v917
      %950 = vmatprep.subr.mxu0 %v949
      %951 = vmatpush1.msra.mxu0 %v948
      %952 = vmatprep.subr.mxu0 %v947
      %953 = vmatpush1.msra.mxu0 %v946
      %954 = vmatprep.subr.mxu0 %v945
      %955 = vmatpush1.msra.mxu0 %v944
      %956 = vmatprep.subr.mxu0 %v943
      %957 = vmatpush1.msra.mxu0 %v942
      %958 = vmatprep.subr.mxu0 %v941
      %959 = vmatpush1.msra.mxu0 %v940
      %960 = vmatprep.subr.mxu0 %v939
      %961 = vmatpush1.msra.mxu0 %v938
      %962 = vmatprep.subr.mxu0 %v937
      %963 = vmatpush1.msra.mxu0 %v936
      %964 = vmatprep.subr.mxu0 %v935
      %965 = vmatpush1.msra.mxu0 %v934
      %966 = vmatprep.subr.mxu0 %v933
      %967 = vmatpush1.msra.mxu0 %v932
      %968 = vmatprep.subr.mxu0 %v931
      %969 = vmatpush1.msra.mxu0 %v930
      %970 = vmatprep.subr.mxu0 %v929
      %971 = vmatpush1.msra.mxu0 %v928
      %972 = vmatprep.subr.mxu0 %v927
      %973 = vmatpush1.msra.mxu0 %v926
      %974 = vmatprep.subr.mxu0 %v925
      %975 = vmatpush1.msra.mxu0 %v924
      %976 = vmatprep.subr.mxu0 %v923
      %977 = vmatpush1.msra.mxu0 %v922
      %978 = vmatprep.subr.mxu0 %v921
      %979 = vmatpush1.msra.mxu0 %v920
      %980 = vmatprep.subr.mxu0 %v919
      %981 = vmatpush1.msra.mxu0 %v918
      %982 = vmatprep.subr.mxu0 0.0
      %983 = vmatpush2.msra.mxu0 0.0
      %984 = vmatprep.subr.mxu0 0.0
      %985 = vmatpush2.msra.mxu0 0.0
      %986 = vmatprep.subr.mxu0 0.0
      %987 = vmatpush2.msra.mxu0 0.0
      %988 = vmatprep.subr.mxu0 0.0
      %989 = vmatpush2.msra.mxu0 0.0
      %990 = vmatprep.subr.mxu0 0.0
      %991 = vmatpush2.msra.mxu0 0.0
      %992 = vmatprep.subr.mxu0 0.0
      %993 = vmatpush2.msra.mxu0 0.0
      %994 = vmatprep.subr.mxu0 0.0
      %995 = vmatpush2.msra.mxu0 0.0
      %996 = vmatprep.subr.mxu0 0.0
      %997 = vmatpush2.msra.mxu0 0.0
      %998 = vmatprep.subr.mxu0 0.0
      %999 = vmatpush2.msra.mxu0 0.0
      %1000 = vmatprep.subr.mxu0 0.0
      %1001 = vmatpush2.msra.mxu0 0.0
      %1002 = vmatprep.subr.mxu0 0.0
      %1003 = vmatpush2.msra.mxu0 0.0
      %1004 = vmatprep.subr.mxu0 0.0
      %1005 = vmatpush2.msra.mxu0 0.0
      %1006 = vmatprep.subr.mxu0 0.0
      %1007 = vmatpush2.msra.mxu0 0.0
      %1008 = vmatprep.subr.mxu0 0.0
      %1009 = vmatpush2.msra.mxu0 0.0
      %1010 = vmatprep.subr.mxu0 0.0
      %1011 = vmatpush2.msra.mxu0 0.0
      %1012 = vmatprep.subr.mxu0 0.0
      %1013 = vmatpush2.msra.mxu0 0.0
      %1014 = vmatprep.mubr.f32.mxu0 0.0
      %1015 = vmatmul.mubr.f32.gmra.mxu0 %v250
      %v1016 = vpop.f32.mrf.mxu0
      %v1017 = vadd.f32 0.0, %v1016
      %v1018 = vpop.f32.mrf.mxu0
      %v1019 = vadd.f32 0.0, %v1018
      %1020 = vdwg.mxu0
      %1021 = vst [vmem:[%s238] sm:$0xff] %v1017
      %1022 = vst [vmem:[%s238 + $0x8] sm:$0xff] %v1019
      %v1023 = vcombine.low %v814, %v853
      %v1025 = vunpack.c.l.s4 1966171168
      %v1026 = vunpack.c.0.s8 %v1025
      %v1027 = vlaneseq
      %v1028 = vshrl.u32 %v1027, 7
      %v1029 = vsub.s32 %v1026, %v1028
      %v1030 = vrot.slane %v1023, %v1029
      %v1032 = vunpack.c.l.s4 1966171168
      %v1033 = vunpack.c.0.s8 %v1032
      %v1034 = vlaneseq
      %v1035 = vshrl.u32 %v1034, 7
      %v1036 = vsub.s32 %v1033, %v1035
      %v1037 = vrot.slane %v1030, %v1036
      %v1038 = vlaneseq
      %vm1039 = vcmp.ge.s32.totalorder %v1038, 0
      %vm1040 = vcmp.lt.s32.totalorder %v1038, 256
      %vm1041 = vmand %vm1039, %vm1040
      %1042 = vst.msk [vmem:[%s243] sm:$0x3] %vm1041, %v1037
      %v1043 = vsub.f32 %v248, %v1017
      %v1044 = vsub.f32 %v249, %v1019
      %v1045 = vmul.f32 %v1043, %v1043
      %v1046 = vmul.f32 %v1044, %v1044
      %v1047 = vadd.f32 %v1045, %v1046
      %1048 = vadd.xlane.f32.xlu0 %v1047
      %v1049 = vpop.xlane.xlu0 %1048
      %v1050 = vrot.slane %v1049, 4
      %v1051 = vadd.f32 %v1049, %v1050
      %v1052 = vrot.slane %v1051, 2
      %v1053 = vadd.f32 %v1051, %v1052
      %v1054 = vrot.slane %v1053, 1
      %v1055 = vadd.f32 %v1053, %v1054
      %1056 = vst [vmem:[%s247] sm:$0x1] %v1055
      %s1057 = smul.u32 2, %s17
      %p1058 = scmp.lt.s32.totalorder %s1057, 3
      %s1059 = scalar_select %p1058, %s1057, 3
      %s1060 = smul.addr %s1059, 8
      %s1061 = scalar_lea.vmem %s3, %s1060
      %s1062 = smul.u32 2, %s17
      %p1063 = scmp.lt.s32.totalorder %s1062, 3
      %s1064 = scalar_select %p1063, %s1062, 3
      %s1065 = scalar_lea.vmem %s4, %s1064
      %p1066 = scmp.lt.s32.totalorder %s17, 1
      %s1067 = scalar_select %p1066, %s17, 1
      %s1068 = scalar_lea.vmem %s5, %s1067
      // Predicated region
      $region33: #{vector_quantizer_forward.1} parent=31 // pred_check
        %p1069 = pneg %p103
      $region34: #{vector_quantizer_forward.1} parent=31 // pred_check_branch
        %1071 = sbr.rel (%p1069) target = $region36
      $region35: #{vector_quantizer_forward.1} parent=31 // pred_region
        %s1072 = smul.u32 2, %s17
      $region36: #{vector_quantizer_forward.1} parent=31 // pred_fallthru
        _
      // Predicated region
      $region37: #{vector_quantizer_forward.1} parent=31 // pred_check
        %p1073 = pneg %p129
      $region38: #{vector_quantizer_forward.1} parent=31 // pred_check_branch
        %1075 = sbr.rel (%p1073) target = $region40
      $region39: #{vector_quantizer_forward.1} parent=31 // pred_region
        %s1076 = smul.u32 2, %s17
      $region40: #{vector_quantizer_forward.1} parent=31 // pred_fallthru
        _
      // Predicated region
      $region41: #{vector_quantizer_forward.1} parent=31 // pred_check
        %p1077 = pneg %p155
      $region42: #{vector_quantizer_forward.1} parent=31 // pred_check_branch
        %1079 = sbr.rel (%p1077) target = $region44
      $region43: #{vector_quantizer_forward.1} parent=31 // pred_region
        _
      $region44: #{vector_quantizer_forward.1} parent=31 // pred_fallthru
        _
    $region32: #{vector_quantizer_forward.1} parent=5 // pred_fallthru
      _
    %p1080 = scmp.le.s32.totalorder 2, %s12
    // Predicated region
    $region45: #{vector_quantizer_forward.1} parent=5 // pred_check
      %p1081 = pneg %p1080
    $region46: #{vector_quantizer_forward.1} parent=5 // pred_check_branch
      %1083 = sbr.rel (%p1081) target = $region48
    $region47: #{vector_quantizer_forward.1} parent=5 // pred_region
      %s1084 = ssub.s32 %s12, 2
      // Predicated region
      $region49: #{vector_quantizer_forward.1} parent=47 // pred_check
        %p1085 = pneg %p109
      $region50: #{vector_quantizer_forward.1} parent=47 // pred_check_branch
        %1087 = sbr.rel (%p1085) target = $region52
      $region51: #{vector_quantizer_forward.1} parent=47 // pred_region
        %s1088 = smul.u32 2, %s18
        %p1089 = scmp.lt.s32.totalorder %s1088, 3
        %s1090 = scalar_select %p1089, %s1088, 3
        %s1091 = smul.addr %s1090, 8
        %s1092 = scalar_lea.vmem %s3, %s1091
      $region52: #{vector_quantizer_forward.1} parent=47 // pred_fallthru
        _
      // Predicated region
      $region53: #{vector_quantizer_forward.1} parent=47 // pred_check
        %p1093 = pneg %p135
      $region54: #{vector_quantizer_forward.1} parent=47 // pred_check_branch
        %1095 = sbr.rel (%p1093) target = $region56
      $region55: #{vector_quantizer_forward.1} parent=47 // pred_region
        %s1096 = smul.u32 2, %s18
        %p1097 = scmp.lt.s32.totalorder %s1096, 3
        %s1098 = scalar_select %p1097, %s1096, 3
        %s1099 = scalar_lea.vmem %s4, %s1098
      $region56: #{vector_quantizer_forward.1} parent=47 // pred_fallthru
        _
      // Predicated region
      $region57: #{vector_quantizer_forward.1} parent=47 // pred_check
        %p1100 = pneg %p161
      $region58: #{vector_quantizer_forward.1} parent=47 // pred_check_branch
        %1102 = sbr.rel (%p1100) target = $region60
      $region59: #{vector_quantizer_forward.1} parent=47 // pred_region
        %p1103 = scmp.lt.s32.totalorder %s18, 1
        %s1104 = scalar_select %p1103, %s18, 1
        %s1105 = scalar_lea.vmem %s5, %s1104
      $region60: #{vector_quantizer_forward.1} parent=47 // pred_fallthru
        _
    $region48: #{vector_quantizer_forward.1} parent=5 // pred_fallthru
      _
  $region6: #{vector_quantizer_forward.1} parent=0 // loop_footer
    %s16 = sadd.s32 1, %s12
  $region7: #{vector_quantizer_forward.1} parent=0 // loop_footer_branch
    %11 = sbr.rel target = $region3
  $region8: #{vector_quantizer_forward.1} parent=0 // loop_exit
    _

</llo_original>
